<compile_context>
chip_gen: v6e
topology: v6e:2x2x1
jax: 0.10.0
libtpu: 0.0.40
codegen_flags: <defaults>
</compile_context>

<pallas_src>
import functools

import jax
import jax.numpy as jnp
from jax.experimental import pallas as pl
from jax.experimental.pallas import tpu as pltpu

SUBLANE = 8  # f32 sublane granularity for the batch tile


def _round_up(n: int, m: int) -> int:
    return ((n + m - 1) // m) * m


def _leaky_relu(v, negative_slope=0.01):
    # F.leaky_relu default negative_slope = 0.01
    return jnp.where(v >= 0, v, negative_slope * v)


def ann_kernel(x_ref, w_in_ref, b_in_ref, w_h_ref, b_h_ref, w_out_ref, b_out_ref,
               o_ref, *, add_sigmoid: bool):
    """One (tb, in_neuron) activation tile through the whole MLP.

    Weights arrive bf16 (MXU-native operands, f32 accumulation); biases, the
    leaky_relu chain and the optional sigmoid stay f32.  Biases are (1, N) and
    broadcast implicitly in the add — no materialized (tb, N) broadcasts.
    """
    x = x_ref[...]                                          # (tb, in) f32

    # input_layer + leaky_relu
    h = jnp.dot(x.astype(jnp.bfloat16), w_in_ref[...],
                preferred_element_type=jnp.float32) + b_in_ref[...]
    h = _leaky_relu(h)

    # hidden_layer applied three times with the SAME weights (as in the PyTorch
    # forward).  Static unroll on purpose: lets the scheduler overlap the MXU
    # drain of layer k with the VPU leaky_relu of layer k-1.
    w_h = w_h_ref[...]
    b_h = b_h_ref[...]
    for _ in range(3):
        h = jnp.dot(h.astype(jnp.bfloat16), w_h,
                    preferred_element_type=jnp.float32) + b_h
        h = _leaky_relu(h)

    # output_layer (+ optional sigmoid) — written at its real width.
    out = jnp.dot(h.astype(jnp.bfloat16), w_out_ref[...],
                  preferred_element_type=jnp.float32) + b_out_ref[...]
    if add_sigmoid:
        out = jax.nn.sigmoid(out)

    o_ref[...] = out.astype(o_ref.dtype)


def init_params(key, in_neuron, hidden_neuron, out_neuron):
    """Deterministic init mimicking nn.Linear's uniform(-1/sqrt(fan_in), ...).
    Weights returned already transposed to (in_features, out_features); biases
    are (1, out_features) so everything stays rank-2."""
    ks = jax.random.split(key, 6)

    def linear(kw, kb, fan_in, fan_out):
        bound = 1.0 / jnp.sqrt(jnp.float32(fan_in))
        w = jax.random.uniform(kw, (fan_in, fan_out), jnp.float32, -bound, bound)
        b = jax.random.uniform(kb, (1, fan_out), jnp.float32, -bound, bound)
        return w, b

    w_in, b_in = linear(ks[0], ks[1], in_neuron, hidden_neuron)
    w_h, b_h = linear(ks[2], ks[3], hidden_neuron, hidden_neuron)
    w_out, b_out = linear(ks[4], ks[5], hidden_neuron, out_neuron)
    return dict(w_in=w_in, b_in=b_in, w_h=w_h, b_h=b_h, w_out=w_out, b_out=b_out)


def prepare_params(p):
    """One-time (out of the per-call path) weight prep: cast weights to bf16
    (MXU-native operands); keep biases f32.  No padding — feature dims stay at
    their natural sizes and are handled as full-extent block dims."""
    return dict(
        w_in=p["w_in"].astype(jnp.bfloat16),
        b_in=p["b_in"],
        w_h=p["w_h"].astype(jnp.bfloat16),
        b_h=p["b_h"],
        w_out=p["w_out"].astype(jnp.bfloat16),
        b_out=p["b_out"],
    )


def ann_forward(x, pp, *, add_sigmoid: bool, batch_tile: int = 2048):
    """x: (batch, in_neuron) f32.  pp: prepared params from prepare_params()."""
    batch, in_n = x.shape
    hid = pp["w_in"].shape[1]
    out_n = pp["w_out"].shape[1]

    # Batch tile: multiple of 8, big enough to amortize the ~0.35 us/step grid
    # overhead, but capped so the grid has >= 2 steps when the batch allows
    # (v7x has 2 TensorCores; with grid=(1,) one of them idles).
    tb = batch_tile
    if batch >= 2 * SUBLANE:
        tb = min(tb, _round_up(pl.cdiv(batch, 2), SUBLANE))
    tb = max(SUBLANE, min(tb, _round_up(batch, SUBLANE)))
    grid = (pl.cdiv(batch, tb),)   # ragged last block handled by Pallas masking

    # Weights/biases: full-array blocks with a constant index_map -> DMA'd once,
    # stay VMEM-resident across all batch tiles.
    def wspec(shape):
        return pl.BlockSpec(shape, lambda i: (0, 0))

    kernel = functools.partial(ann_kernel, add_sigmoid=add_sigmoid)

    weight_bytes = sum(int(v.size) * v.dtype.itemsize for v in pp.values())
    cost = pl.CostEstimate(
        flops=2 * batch * (in_n * hid + 3 * hid * hid + hid * out_n),
        transcendentals=batch * out_n if add_sigmoid else 0,
        bytes_accessed=batch * (in_n + out_n) * 4 + weight_bytes,
    )

    out = pl.pallas_call(
        kernel,
        out_shape=jax.ShapeDtypeStruct((batch, out_n), jnp.float32),
        grid=grid,
        in_specs=[
            pl.BlockSpec((tb, in_n), lambda i: (i, 0)),   # streamed activations (no pad)
            wspec((in_n, hid)), wspec((1, hid)),          # input layer
            wspec((hid, hid)), wspec((1, hid)),           # shared hidden layer
            wspec((hid, out_n)), wspec((1, out_n)),       # output layer
        ],
        out_specs=pl.BlockSpec((tb, out_n), lambda i: (i, 0)),  # real-width output
        compiler_params=pltpu.CompilerParams(
            # Batch tiles are independent -> shard across v7x's 2 TCs
            # (no-op on v5e/v6e). 32 MiB limit covers v5e's 16 MiB scoped default.
            dimension_semantics=("parallel",),
            vmem_limit_bytes=32 * 1024 * 1024,
        ),
        cost_estimate=cost,
    )(x, pp["w_in"], pp["b_in"], pp["w_h"], pp["b_h"], pp["w_out"], pp["b_out"])

    return out


def ann_reference(x, p, *, add_sigmoid):
    """Pure-JAX reference with matching bf16 quantization of the dot operands."""
    def dot(a, w):
        return jnp.dot(a.astype(jnp.bfloat16), w.astype(jnp.bfloat16),
                       preferred_element_type=jnp.float32)

    h = _leaky_relu(dot(x, p["w_in"]) + p["b_in"])
    for _ in range(3):
        h = _leaky_relu(dot(h, p["w_h"]) + p["b_h"])
    out = dot(h, p["w_out"]) + p["b_out"]
    if add_sigmoid:
        out = jax.nn.sigmoid(out)
    return out


if __name__ == "__main__":
    key = jax.random.PRNGKey(0)
    k_x, k_p = jax.random.split(key)

    batch, in_neuron, hidden_neuron, out_neuron = 8, 16, 32, 4
    add_sigmoid = True  # config.NN_add_sigmoid

    x = jax.random.normal(k_x, (batch, in_neuron), jnp.float32)
    params = init_params(k_p, in_neuron, hidden_neuron, out_neuron)
    prepared = prepare_params(params)   # once, outside the per-call path

    out = ann_forward(x, prepared, add_sigmoid=add_sigmoid)
    out = jax.block_until_ready(out)

    ref = ann_reference(x, params, add_sigmoid=add_sigmoid)
    assert out.shape == (batch, out_neuron)
    assert jnp.allclose(out, ref, atol=2e-4, rtol=2e-4), "mismatch vs pure-JAX reference"

    print("KERNEL_OK")
</pallas_src>

<mosaic_0001>
module attributes {stable_mosaic.version = 11 : i64} {
  func.func @ann_kernel(%arg0: i32, %arg1: memref<8x16xf32, #tpu.memory_space<vmem>>, %arg2: memref<16x32xbf16, #tpu.memory_space<vmem>>, %arg3: memref<1x32xf32, #tpu.memory_space<vmem>>, %arg4: memref<32x32xbf16, #tpu.memory_space<vmem>>, %arg5: memref<1x32xf32, #tpu.memory_space<vmem>>, %arg6: memref<32x4xbf16, #tpu.memory_space<vmem>>, %arg7: memref<1x4xf32, #tpu.memory_space<vmem>>, %arg8: memref<8x4xf32, #tpu.memory_space<vmem>>) attributes {dimension_semantics = [#tpu.dimension_semantics<parallel>], iteration_bounds = array<i64: 1>, scalar_prefetch = 0 : i64, scratch_operands = 0 : i64, tpu.core_type = #tpu.core_type<tc>, window_params = [{transform_indices = @transform_0, window_bounds = array<i64: 8, 16>}, {pipeline_mode = #tpu.pipeline_mode<synchronous>, transform_indices = @transform_1, window_bounds = array<i64: 16, 32>}, {pipeline_mode = #tpu.pipeline_mode<synchronous>, transform_indices = @transform_2, window_bounds = array<i64: 1, 32>}, {pipeline_mode = #tpu.pipeline_mode<synchronous>, transform_indices = @transform_3, window_bounds = array<i64: 32, 32>}, {pipeline_mode = #tpu.pipeline_mode<synchronous>, transform_indices = @transform_4, window_bounds = array<i64: 1, 32>}, {pipeline_mode = #tpu.pipeline_mode<synchronous>, transform_indices = @transform_5, window_bounds = array<i64: 32, 4>}, {pipeline_mode = #tpu.pipeline_mode<synchronous>, transform_indices = @transform_6, window_bounds = array<i64: 1, 4>}, {transform_indices = @transform_7, window_bounds = array<i64: 8, 4>}]} {
    %c0 = arith.constant 0 : index
    %c0_0 = arith.constant 0 : index
    %0 = vector.load %arg1[%c0, %c0_0] : memref<8x16xf32, #tpu.memory_space<vmem>>, vector<8x16xf32>
    %1 = arith.truncf %0 : vector<8x16xf32> to vector<8x16xbf16>
    %c0_1 = arith.constant 0 : index
    %c0_2 = arith.constant 0 : index
    %2 = vector.load %arg2[%c0_1, %c0_2] : memref<16x32xbf16, #tpu.memory_space<vmem>>, vector<16x32xbf16>
    %cst = arith.constant dense<0.000000e+00> : vector<8x32xf32>
    %3 = tpu.matmul %1, %2, %cst {dimension_numbers = #tpu.dot_dimension_numbers<[1], [0], [0], [1], [0, 0, 1, 1], [], []>} : vector<8x16xbf16>, vector<16x32xbf16>, vector<8x32xf32> -> vector<8x32xf32>
    %c0_3 = arith.constant 0 : index
    %c0_4 = arith.constant 0 : index
    %4 = vector.load %arg3[%c0_3, %c0_4] : memref<1x32xf32, #tpu.memory_space<vmem>>, vector<1x32xf32>
    %5 = vector.broadcast %4 : vector<1x32xf32> to vector<8x32xf32>
    %6 = arith.addf %3, %5 : vector<8x32xf32>
    %cst_5 = arith.constant 0.000000e+00 : f32
    %7 = vector.broadcast %cst_5 : f32 to vector<8x32xf32>
    %8 = arith.cmpf oge, %6, %7 : vector<8x32xf32>
    %cst_6 = arith.constant 0.00999999977 : f32
    %9 = vector.broadcast %cst_6 : f32 to vector<8x32xf32>
    %10 = arith.mulf %9, %6 : vector<8x32xf32>
    %11 = arith.select %8, %6, %10 : vector<8x32xi1>, vector<8x32xf32>
    %c0_7 = arith.constant 0 : index
    %c0_8 = arith.constant 0 : index
    %12 = vector.load %arg4[%c0_7, %c0_8] : memref<32x32xbf16, #tpu.memory_space<vmem>>, vector<32x32xbf16>
    %c0_9 = arith.constant 0 : index
    %c0_10 = arith.constant 0 : index
    %13 = vector.load %arg5[%c0_9, %c0_10] : memref<1x32xf32, #tpu.memory_space<vmem>>, vector<1x32xf32>
    %14 = arith.truncf %11 : vector<8x32xf32> to vector<8x32xbf16>
    %cst_11 = arith.constant dense<0.000000e+00> : vector<8x32xf32>
    %15 = tpu.matmul %14, %12, %cst_11 {dimension_numbers = #tpu.dot_dimension_numbers<[1], [0], [0], [1], [0, 0, 1, 1], [], []>} : vector<8x32xbf16>, vector<32x32xbf16>, vector<8x32xf32> -> vector<8x32xf32>
    %16 = vector.broadcast %13 : vector<1x32xf32> to vector<8x32xf32>
    %17 = arith.addf %15, %16 : vector<8x32xf32>
    %cst_12 = arith.constant 0.000000e+00 : f32
    %18 = vector.broadcast %cst_12 : f32 to vector<8x32xf32>
    %19 = arith.cmpf oge, %17, %18 : vector<8x32xf32>
    %cst_13 = arith.constant 0.00999999977 : f32
    %20 = vector.broadcast %cst_13 : f32 to vector<8x32xf32>
    %21 = arith.mulf %20, %17 : vector<8x32xf32>
    %22 = arith.select %19, %17, %21 : vector<8x32xi1>, vector<8x32xf32>
    %23 = arith.truncf %22 : vector<8x32xf32> to vector<8x32xbf16>
    %cst_14 = arith.constant dense<0.000000e+00> : vector<8x32xf32>
    %24 = tpu.matmul %23, %12, %cst_14 {dimension_numbers = #tpu.dot_dimension_numbers<[1], [0], [0], [1], [0, 0, 1, 1], [], []>} : vector<8x32xbf16>, vector<32x32xbf16>, vector<8x32xf32> -> vector<8x32xf32>
    %25 = vector.broadcast %13 : vector<1x32xf32> to vector<8x32xf32>
    %26 = arith.addf %24, %25 : vector<8x32xf32>
    %cst_15 = arith.constant 0.000000e+00 : f32
    %27 = vector.broadcast %cst_15 : f32 to vector<8x32xf32>
    %28 = arith.cmpf oge, %26, %27 : vector<8x32xf32>
    %cst_16 = arith.constant 0.00999999977 : f32
    %29 = vector.broadcast %cst_16 : f32 to vector<8x32xf32>
    %30 = arith.mulf %29, %26 : vector<8x32xf32>
    %31 = arith.select %28, %26, %30 : vector<8x32xi1>, vector<8x32xf32>
    %32 = arith.truncf %31 : vector<8x32xf32> to vector<8x32xbf16>
    %cst_17 = arith.constant dense<0.000000e+00> : vector<8x32xf32>
    %33 = tpu.matmul %32, %12, %cst_17 {dimension_numbers = #tpu.dot_dimension_numbers<[1], [0], [0], [1], [0, 0, 1, 1], [], []>} : vector<8x32xbf16>, vector<32x32xbf16>, vector<8x32xf32> -> vector<8x32xf32>
    %34 = vector.broadcast %13 : vector<1x32xf32> to vector<8x32xf32>
    %35 = arith.addf %33, %34 : vector<8x32xf32>
    %cst_18 = arith.constant 0.000000e+00 : f32
    %36 = vector.broadcast %cst_18 : f32 to vector<8x32xf32>
    %37 = arith.cmpf oge, %35, %36 : vector<8x32xf32>
    %cst_19 = arith.constant 0.00999999977 : f32
    %38 = vector.broadcast %cst_19 : f32 to vector<8x32xf32>
    %39 = arith.mulf %38, %35 : vector<8x32xf32>
    %40 = arith.select %37, %35, %39 : vector<8x32xi1>, vector<8x32xf32>
    %41 = arith.truncf %40 : vector<8x32xf32> to vector<8x32xbf16>
    %c0_20 = arith.constant 0 : index
    %c0_21 = arith.constant 0 : index
    %42 = vector.load %arg6[%c0_20, %c0_21] : memref<32x4xbf16, #tpu.memory_space<vmem>>, vector<32x4xbf16>
    %cst_22 = arith.constant dense<0.000000e+00> : vector<8x4xf32>
    %43 = tpu.matmul %41, %42, %cst_22 {dimension_numbers = #tpu.dot_dimension_numbers<[1], [0], [0], [1], [0, 0, 1, 1], [], []>} : vector<8x32xbf16>, vector<32x4xbf16>, vector<8x4xf32> -> vector<8x4xf32>
    %c0_23 = arith.constant 0 : index
    %c0_24 = arith.constant 0 : index
    %44 = vector.load %arg7[%c0_23, %c0_24] : memref<1x4xf32, #tpu.memory_space<vmem>>, vector<1x4xf32>
    %45 = vector.broadcast %44 : vector<1x4xf32> to vector<8x4xf32>
    %46 = arith.addf %43, %45 : vector<8x4xf32>
    %47 = arith.negf %46 : vector<8x4xf32>
    %48 = math.exp %47 : vector<8x4xf32>
    %cst_25 = arith.constant 1.000000e+00 : f32
    %49 = vector.broadcast %cst_25 : f32 to vector<8x4xf32>
    %50 = arith.addf %49, %48 : vector<8x4xf32>
    %51 = arith.divf %49, %50 : vector<8x4xf32>
    %c0_26 = arith.constant 0 : index
    %c0_27 = arith.constant 0 : index
    %52 = vector.load %arg8[%c0_26, %c0_27] : memref<8x4xf32, #tpu.memory_space<vmem>>, vector<8x4xf32>
    tpu.vector_store %arg8[%c0_26, %c0_27], %51 {strides = array<i32>} : memref<8x4xf32, #tpu.memory_space<vmem>>, vector<8x4xf32>,
    return
  }
  func.func @transform_0(%arg0: i32) -> (i32, i32) {
    %c0_i32 = arith.constant 0 : i32
    %c0_i32_0 = arith.constant 0 : i32
    return %arg0, %c0_i32 : i32, i32
  }
  func.func @transform_1(%arg0: i32) -> (i32, i32) {
    %c0_i32 = arith.constant 0 : i32
    %c0_i32_0 = arith.constant 0 : i32
    %c0_i32_1 = arith.constant 0 : i32
    return %c0_i32, %c0_i32_0 : i32, i32
  }
  func.func @transform_2(%arg0: i32) -> (i32, i32) {
    %c0_i32 = arith.constant 0 : i32
    %c0_i32_0 = arith.constant 0 : i32
    %c0_i32_1 = arith.constant 0 : i32
    return %c0_i32, %c0_i32_0 : i32, i32
  }
  func.func @transform_3(%arg0: i32) -> (i32, i32) {
    %c0_i32 = arith.constant 0 : i32
    %c0_i32_0 = arith.constant 0 : i32
    %c0_i32_1 = arith.constant 0 : i32
    return %c0_i32, %c0_i32_0 : i32, i32
  }
  func.func @transform_4(%arg0: i32) -> (i32, i32) {
    %c0_i32 = arith.constant 0 : i32
    %c0_i32_0 = arith.constant 0 : i32
    %c0_i32_1 = arith.constant 0 : i32
    return %c0_i32, %c0_i32_0 : i32, i32
  }
  func.func @transform_5(%arg0: i32) -> (i32, i32) {
    %c0_i32 = arith.constant 0 : i32
    %c0_i32_0 = arith.constant 0 : i32
    %c0_i32_1 = arith.constant 0 : i32
    return %c0_i32, %c0_i32_0 : i32, i32
  }
  func.func @transform_6(%arg0: i32) -> (i32, i32) {
    %c0_i32 = arith.constant 0 : i32
    %c0_i32_0 = arith.constant 0 : i32
    %c0_i32_1 = arith.constant 0 : i32
    return %c0_i32, %c0_i32_0 : i32, i32
  }
  func.func @transform_7(%arg0: i32) -> (i32, i32) {
    %c0_i32 = arith.constant 0 : i32
    %c0_i32_0 = arith.constant 0 : i32
    return %arg0, %c0_i32 : i32, i32
  }
}

</mosaic_0001>

<llo_original>
// kernel: tpu_custom_call.1
$region0: #{tpu_custom_call.1}
  #allocation0 [shape = 'u32[]', space=smem, size = 0x4, offset = 0x4, fixed_abs, tag = 'smem constant byte address 0x4 - core index']
  #allocation1 [shape = 'u32[144,128]{1,0:T(1,128)}', space=vmem, size = 0x12000, scoped, tag = 'internal scratch']
  %s0 = inlined_call_operand.hbm [shape: f32[8,16], index: 0, kind: input, shape index: {}]
  %s1 = inlined_call_operand.hbm [shape: bf16[16,32], index: 1, kind: input, shape index: {}]
  %s2 = inlined_call_operand.vmem [shape: f32[1,32], index: 2, kind: input, shape index: {}]
  %s3 = inlined_call_operand.vmem [shape: bf16[32,32], index: 3, kind: input, shape index: {}]
  %s4 = inlined_call_operand.vmem [shape: f32[1,32], index: 4, kind: input, shape index: {}]
  %s5 = inlined_call_operand.vmem [shape: bf16[32,4], index: 5, kind: input, shape index: {}]
  %s6 = inlined_call_operand.vmem [shape: f32[1,4], index: 6, kind: input, shape index: {}]
  %s7 = inlined_call_operand.vmem [shape: f32[8,4], index: 7, kind: output, shape index: {}]
  %s8 = sld [smem:[#allocation0]]
  $region46: #{tpu_custom_call.1} parent=0
    _
  %s10 = ssub.s32 1, %s8
  %s11 = scalar_select 0, %s10, %s8
  $region1: #{tpu_custom_call.1} parent=0
    #allocation2 [shape = 'u8[4096]{0}', space=vmem, size = 0x1000, scoped, tag = 'input window, operand 0, single buffered']
    #allocation3 [shape = 's32[1]{0}', space=sflag, size = 0x4, scoped, tag = 'scoped memory for tpu_custom_call.1']
    #allocation4 [shape = 'u8[4096]{0}', space=vmem, size = 0x1000, scoped, tag = 'input window, operand 1, single buffered']
    #allocation5 [shape = 's32[1]{0}', space=sflag, size = 0x4, scoped, tag = 'scoped memory for tpu_custom_call.1']
    %12 = vsyncpa [#allocation3], 0
    %13 = vsyncpa [#allocation5], 0
    // Predicated region
    $region2: #{tpu_custom_call.1} parent=1 // pred_check
      _
    $region3: #{tpu_custom_call.1} parent=1 // pred_check_branch
      %15 = sbr.rel (0) target = $region5
    $region4: #{tpu_custom_call.1} parent=1 // pred_region
      %s17 = ssub.s32 128, 128
      %18 = vsyncadd [#allocation3], %s17
      %s20 = sshll.u32 [#allocation2], 4
      %s21 = int_to_ptr.vmem [resolvable:$true] %s20
      %23 = dma.hbm_to_vmem [thread:$0]  %s0, 128, %s21, [#allocation3]
    $region5: #{tpu_custom_call.1} parent=1 // pred_fallthru
      _
    // Predicated region
    $region6: #{tpu_custom_call.1} parent=1 // pred_check
      _
    $region7: #{tpu_custom_call.1} parent=1 // pred_check_branch
      %25 = sbr.rel (0) target = $region9
    $region8: #{tpu_custom_call.1} parent=1 // pred_region
      %s27 = ssub.s32 128, 128
      %28 = vsyncadd [#allocation5], %s27
      %s29 = sshll.u32 [#allocation4], 4
      %s30 = int_to_ptr.vmem [resolvable:$true] %s29
      %35 = dma.hbm_to_vmem [thread:$0]  %s1, 128, %s30, [#allocation5], 64, 64, 4
    $region9: #{tpu_custom_call.1} parent=1 // pred_fallthru
      _
    // Predicated region
    $region10: #{tpu_custom_call.1} parent=1 // pred_check
      _
    $region11: #{tpu_custom_call.1} parent=1 // pred_check_branch
      %37 = sbr.rel (0) target = $region13
    $region12: #{tpu_custom_call.1} parent=1 // pred_region
      _
    $region13: #{tpu_custom_call.1} parent=1 // pred_fallthru
      _
    // Predicated region
    $region14: #{tpu_custom_call.1} parent=1 // pred_check
      _
    $region15: #{tpu_custom_call.1} parent=1 // pred_check_branch
      %39 = sbr.rel (0) target = $region17
    $region16: #{tpu_custom_call.1} parent=1 // pred_region
      _
    $region17: #{tpu_custom_call.1} parent=1 // pred_fallthru
      _
    // Predicated region
    $region18: #{tpu_custom_call.1} parent=1 // pred_check
      _
    $region19: #{tpu_custom_call.1} parent=1 // pred_check_branch
      %41 = sbr.rel (0) target = $region21
    $region20: #{tpu_custom_call.1} parent=1 // pred_region
      _
    $region21: #{tpu_custom_call.1} parent=1 // pred_fallthru
      _
    // Predicated region
    $region22: #{tpu_custom_call.1} parent=1 // pred_check
      _
    $region23: #{tpu_custom_call.1} parent=1 // pred_check_branch
      %43 = sbr.rel (0) target = $region25
    $region24: #{tpu_custom_call.1} parent=1 // pred_region
      _
    $region25: #{tpu_custom_call.1} parent=1 // pred_fallthru
      _
    // Predicated region
    $region26: #{tpu_custom_call.1} parent=1 // pred_check
      _
    $region27: #{tpu_custom_call.1} parent=1 // pred_check_branch
      %45 = sbr.rel (0) target = $region29
    $region28: #{tpu_custom_call.1} parent=1 // pred_region
      _
    $region29: #{tpu_custom_call.1} parent=1 // pred_fallthru
      _
    // Predicated region
    $region30: #{tpu_custom_call.1} parent=1 // pred_check
      _
    $region31: #{tpu_custom_call.1} parent=1 // pred_check_branch
      %47 = sbr.rel (0) target = $region33
    $region32: #{tpu_custom_call.1} parent=1 // pred_region
      %48 = dma.done [#allocation3], 128
    $region33: #{tpu_custom_call.1} parent=1 // pred_fallthru
      _
    // Predicated region
    $region34: #{tpu_custom_call.1} parent=1 // pred_check
      _
    $region35: #{tpu_custom_call.1} parent=1 // pred_check_branch
      %50 = sbr.rel (0) target = $region37
    $region36: #{tpu_custom_call.1} parent=1 // pred_region
      %51 = dma.done [#allocation5], 128
    $region37: #{tpu_custom_call.1} parent=1 // pred_fallthru
      _
    %v53 = vld [vmem:[#allocation2] sm:$0xff]
    %v54 = vpack.c.bf16 %v53, %v53
    %v55 = vld [vmem:[#allocation4] sm:$0xf]
    %v56 = vld [vmem:[#allocation4 + $0x4] sm:$0xf]
    %v57 = vld [vmem:[%s2] sm:$0x1]
    %v59 = vlaneseq
    %v60 = vshrl.u32 %v59, 7
    %v61 = vsub.s32 0, %v60
    %v62 = vrot.slane %v57, %v61
    %v66 = vunpack.c.l.b16 %v55
    %v67 = vunpack.c.l.b16 %v56
    %v68 = vpack.c.b16 %v67, %v66
    %vm70 = vcmask 130048
    %v72 = vsel %vm70, %v54, 0
    %74 = vmatprep.subr.bf16.mxu0 0
    %75 = vmatpush1.bf16.msra.mxu0 0
    %76 = vmatprep.subr.bf16.mxu0 0
    %77 = vmatpush1.bf16.msra.mxu0 0
    %78 = vmatprep.subr.bf16.mxu0 0
    %79 = vmatpush1.bf16.msra.mxu0 0
    %80 = vmatprep.subr.bf16.mxu0 0
    %81 = vmatpush1.bf16.msra.mxu0 0
    %82 = vmatprep.subr.bf16.mxu0 0
    %83 = vmatpush1.bf16.msra.mxu0 0
    %84 = vmatprep.subr.bf16.mxu0 0
    %85 = vmatpush1.bf16.msra.mxu0 0
    %86 = vmatprep.subr.bf16.mxu0 0
    %87 = vmatpush1.bf16.msra.mxu0 0
    %88 = vmatprep.subr.bf16.mxu0 0
    %89 = vmatpush1.bf16.msra.mxu0 %v68
    %90 = vmatprep.subr.bf16.mxu0 0
    %91 = vmatpush2.bf16.msra.mxu0 0
    %92 = vmatprep.subr.bf16.mxu0 0
    %93 = vmatpush2.bf16.msra.mxu0 0
    %94 = vmatprep.subr.bf16.mxu0 0
    %95 = vmatpush2.bf16.msra.mxu0 0
    %96 = vmatprep.subr.bf16.mxu0 0
    %97 = vmatpush2.bf16.msra.mxu0 0
    %98 = vmatprep.subr.bf16.mxu0 0
    %99 = vmatpush2.bf16.msra.mxu0 0
    %100 = vmatprep.subr.bf16.mxu0 0
    %101 = vmatpush2.bf16.msra.mxu0 0
    %102 = vmatprep.subr.bf16.mxu0 0
    %103 = vmatpush2.bf16.msra.mxu0 0
    %104 = vmatprep.subr.bf16.mxu0 0
    %105 = vmatpush2.bf16.msra.mxu0 0
    %106 = vmatprep.mubr.bf16.mxu0 0
    %107 = vmatmul.mubr.bf16.gmra.mxu0 %v72
    %v108 = vpop.f32.mrf.mxu0
    %v109 = vadd.f32 %v62, %v108
    %v110 = vpop.f32.mrf.mxu0
    %v111 = vpop.f32.mrf.mxu0
    %v112 = vpop.f32.mrf.mxu0
    %113 = vdwg.mxu0
    %vm114 = vcmp.ge.f32.partialorder %v109, 0.0
    %v115 = vmul.f32 %v109, 0.01
    %v116 = vsel %vm114, %v109, %v115
    %v117 = vld [vmem:[%s3] sm:$0xf]
    %v118 = vld [vmem:[%s3 + $0x4] sm:$0xf]
    %v119 = vld [vmem:[%s3 + $0x8] sm:$0xf]
    %v120 = vld [vmem:[%s3 + $0xc] sm:$0xf]
    %v121 = vld [vmem:[%s4] sm:$0x1]
    %v122 = vpack.c.bf16 %v116, %v116
    %v124 = vlaneseq
    %v125 = vshrl.u32 %v124, 7
    %v126 = vsub.s32 0, %v125
    %v127 = vrot.slane %v121, %v126
    %v133 = vunpack.c.l.b16 %v117
    %v134 = vunpack.c.l.b16 %v118
    %v135 = vunpack.c.l.b16 %v119
    %v136 = vunpack.c.l.b16 %v120
    %v137 = vpack.c.b16 %v134, %v133
    %v138 = vpack.c.b16 %v136, %v135
    %vm141 = vcmask 261120
    %v143 = vsel %vm141, %v122, 0
    %145 = vmatprep.subr.bf16.mxu0 0
    %146 = vmatpush1.bf16.msra.mxu0 0
    %147 = vmatprep.subr.bf16.mxu0 0
    %148 = vmatpush1.bf16.msra.mxu0 0
    %149 = vmatprep.subr.bf16.mxu0 0
    %150 = vmatpush1.bf16.msra.mxu0 0
    %151 = vmatprep.subr.bf16.mxu0 0
    %152 = vmatpush1.bf16.msra.mxu0 0
    %153 = vmatprep.subr.bf16.mxu0 0
    %154 = vmatpush1.bf16.msra.mxu0 0
    %155 = vmatprep.subr.bf16.mxu0 0
    %156 = vmatpush1.bf16.msra.mxu0 0
    %157 = vmatprep.subr.bf16.mxu0 0
    %158 = vmatpush1.bf16.msra.mxu0 %v138
    %159 = vmatprep.subr.bf16.mxu0 0
    %160 = vmatpush1.bf16.msra.mxu0 %v137
    %161 = vmatprep.subr.bf16.mxu0 0
    %162 = vmatpush2.bf16.msra.mxu0 0
    %163 = vmatprep.subr.bf16.mxu0 0
    %164 = vmatpush2.bf16.msra.mxu0 0
    %165 = vmatprep.subr.bf16.mxu0 0
    %166 = vmatpush2.bf16.msra.mxu0 0
    %167 = vmatprep.subr.bf16.mxu0 0
    %168 = vmatpush2.bf16.msra.mxu0 0
    %169 = vmatprep.subr.bf16.mxu0 0
    %170 = vmatpush2.bf16.msra.mxu0 0
    %171 = vmatprep.subr.bf16.mxu0 0
    %172 = vmatpush2.bf16.msra.mxu0 0
    %173 = vmatprep.subr.bf16.mxu0 0
    %174 = vmatpush2.bf16.msra.mxu0 0
    %175 = vmatprep.subr.bf16.mxu0 0
    %176 = vmatpush2.bf16.msra.mxu0 0
    %177 = vmatprep.mubr.bf16.mxu0 0
    %178 = vmatmul.mubr.bf16.gmra.mxu0 %v143
    %v179 = vpop.f32.mrf.mxu0
    %v180 = vadd.f32 %v127, %v179
    %v181 = vpop.f32.mrf.mxu0
    %v182 = vpop.f32.mrf.mxu0
    %v183 = vpop.f32.mrf.mxu0
    %184 = vdwg.mxu0
    %vm185 = vcmp.ge.f32.partialorder %v180, 0.0
    %v186 = vmul.f32 %v180, 0.01
    %v187 = vsel %vm185, %v180, %v186
    %v188 = vpack.c.bf16 %v187, %v187
    %v190 = vsel %vm141, %v188, 0
    %192 = vmatprep.subr.bf16.mxu0 0
    %193 = vmatpush1.bf16.msra.mxu0 0
    %194 = vmatprep.subr.bf16.mxu0 0
    %195 = vmatpush1.bf16.msra.mxu0 0
    %196 = vmatprep.subr.bf16.mxu0 0
    %197 = vmatpush1.bf16.msra.mxu0 0
    %198 = vmatprep.subr.bf16.mxu0 0
    %199 = vmatpush1.bf16.msra.mxu0 0
    %200 = vmatprep.subr.bf16.mxu0 0
    %201 = vmatpush1.bf16.msra.mxu0 0
    %202 = vmatprep.subr.bf16.mxu0 0
    %203 = vmatpush1.bf16.msra.mxu0 0
    %204 = vmatprep.subr.bf16.mxu0 0
    %205 = vmatpush1.bf16.msra.mxu0 %v138
    %206 = vmatprep.subr.bf16.mxu0 0
    %207 = vmatpush1.bf16.msra.mxu0 %v137
    %208 = vmatprep.subr.bf16.mxu0 0
    %209 = vmatpush2.bf16.msra.mxu0 0
    %210 = vmatprep.subr.bf16.mxu0 0
    %211 = vmatpush2.bf16.msra.mxu0 0
    %212 = vmatprep.subr.bf16.mxu0 0
    %213 = vmatpush2.bf16.msra.mxu0 0
    %214 = vmatprep.subr.bf16.mxu0 0
    %215 = vmatpush2.bf16.msra.mxu0 0
    %216 = vmatprep.subr.bf16.mxu0 0
    %217 = vmatpush2.bf16.msra.mxu0 0
    %218 = vmatprep.subr.bf16.mxu0 0
    %219 = vmatpush2.bf16.msra.mxu0 0
    %220 = vmatprep.subr.bf16.mxu0 0
    %221 = vmatpush2.bf16.msra.mxu0 0
    %222 = vmatprep.subr.bf16.mxu0 0
    %223 = vmatpush2.bf16.msra.mxu0 0
    %224 = vmatprep.mubr.bf16.mxu0 0
    %225 = vmatmul.mubr.bf16.gmra.mxu0 %v190
    %v226 = vpop.f32.mrf.mxu0
    %v227 = vadd.f32 %v127, %v226
    %v228 = vpop.f32.mrf.mxu0
    %v229 = vpop.f32.mrf.mxu0
    %v230 = vpop.f32.mrf.mxu0
    %231 = vdwg.mxu0
    %vm232 = vcmp.ge.f32.partialorder %v227, 0.0
    %v233 = vmul.f32 %v227, 0.01
    %v234 = vsel %vm232, %v227, %v233
    %v235 = vpack.c.bf16 %v234, %v234
    %v237 = vsel %vm141, %v235, 0
    %239 = vmatprep.subr.bf16.mxu0 0
    %240 = vmatpush1.bf16.msra.mxu0 0
    %241 = vmatprep.subr.bf16.mxu0 0
    %242 = vmatpush1.bf16.msra.mxu0 0
    %243 = vmatprep.subr.bf16.mxu0 0
    %244 = vmatpush1.bf16.msra.mxu0 0
    %245 = vmatprep.subr.bf16.mxu0 0
    %246 = vmatpush1.bf16.msra.mxu0 0
    %247 = vmatprep.subr.bf16.mxu0 0
    %248 = vmatpush1.bf16.msra.mxu0 0
    %249 = vmatprep.subr.bf16.mxu0 0
    %250 = vmatpush1.bf16.msra.mxu0 0
    %251 = vmatprep.subr.bf16.mxu0 0
    %252 = vmatpush1.bf16.msra.mxu0 %v138
    %253 = vmatprep.subr.bf16.mxu0 0
    %254 = vmatpush1.bf16.msra.mxu0 %v137
    %255 = vmatprep.subr.bf16.mxu0 0
    %256 = vmatpush2.bf16.msra.mxu0 0
    %257 = vmatprep.subr.bf16.mxu0 0
    %258 = vmatpush2.bf16.msra.mxu0 0
    %259 = vmatprep.subr.bf16.mxu0 0
    %260 = vmatpush2.bf16.msra.mxu0 0
    %261 = vmatprep.subr.bf16.mxu0 0
    %262 = vmatpush2.bf16.msra.mxu0 0
    %263 = vmatprep.subr.bf16.mxu0 0
    %264 = vmatpush2.bf16.msra.mxu0 0
    %265 = vmatprep.subr.bf16.mxu0 0
    %266 = vmatpush2.bf16.msra.mxu0 0
    %267 = vmatprep.subr.bf16.mxu0 0
    %268 = vmatpush2.bf16.msra.mxu0 0
    %269 = vmatprep.subr.bf16.mxu0 0
    %270 = vmatpush2.bf16.msra.mxu0 0
    %271 = vmatprep.mubr.bf16.mxu0 0
    %272 = vmatmul.mubr.bf16.gmra.mxu0 %v237
    %v273 = vpop.f32.mrf.mxu0
    %v274 = vadd.f32 %v127, %v273
    %v275 = vpop.f32.mrf.mxu0
    %v276 = vpop.f32.mrf.mxu0
    %v277 = vpop.f32.mrf.mxu0
    %278 = vdwg.mxu0
    %vm279 = vcmp.ge.f32.partialorder %v274, 0.0
    %v280 = vmul.f32 %v274, 0.01
    %v281 = vsel %vm279, %v274, %v280
    %v282 = vpack.c.bf16 %v281, %v281
    %v283 = vld [vmem:[%s5] sm:$0xf]
    %v284 = vld [vmem:[%s5 + $0x4] sm:$0xf]
    %v285 = vld [vmem:[%s5 + $0x8] sm:$0xf]
    %v286 = vld [vmem:[%s5 + $0xc] sm:$0xf]
    %v287 = vld [vmem:[%s6] sm:$0x1]
    %v289 = vlaneseq
    %v290 = vshrl.u32 %v289, 7
    %v291 = vsub.s32 0, %v290
    %v292 = vrot.slane %v287, %v291
    %v298 = vunpack.c.l.b16 %v283
    %v299 = vunpack.c.l.b16 %v284
    %v300 = vunpack.c.l.b16 %v285
    %v301 = vunpack.c.l.b16 %v286
    %v302 = vpack.c.b16 %v299, %v298
    %v303 = vpack.c.b16 %v301, %v300
    %v307 = vsel %vm141, %v282, 0
    %309 = vmatprep.subr.bf16.mxu0 0
    %310 = vmatpush1.bf16.msra.mxu0 0
    %311 = vmatprep.subr.bf16.mxu0 0
    %312 = vmatpush1.bf16.msra.mxu0 0
    %313 = vmatprep.subr.bf16.mxu0 0
    %314 = vmatpush1.bf16.msra.mxu0 0
    %315 = vmatprep.subr.bf16.mxu0 0
    %316 = vmatpush1.bf16.msra.mxu0 0
    %317 = vmatprep.subr.bf16.mxu0 0
    %318 = vmatpush1.bf16.msra.mxu0 0
    %319 = vmatprep.subr.bf16.mxu0 0
    %320 = vmatpush1.bf16.msra.mxu0 0
    %321 = vmatprep.subr.bf16.mxu0 0
    %322 = vmatpush1.bf16.msra.mxu0 %v303
    %323 = vmatprep.subr.bf16.mxu0 0
    %324 = vmatpush1.bf16.msra.mxu0 %v302
    %325 = vmatprep.subr.bf16.mxu0 0
    %326 = vmatpush2.bf16.msra.mxu0 0
    %327 = vmatprep.subr.bf16.mxu0 0
    %328 = vmatpush2.bf16.msra.mxu0 0
    %329 = vmatprep.subr.bf16.mxu0 0
    %330 = vmatpush2.bf16.msra.mxu0 0
    %331 = vmatprep.subr.bf16.mxu0 0
    %332 = vmatpush2.bf16.msra.mxu0 0
    %333 = vmatprep.subr.bf16.mxu0 0
    %334 = vmatpush2.bf16.msra.mxu0 0
    %335 = vmatprep.subr.bf16.mxu0 0
    %336 = vmatpush2.bf16.msra.mxu0 0
    %337 = vmatprep.subr.bf16.mxu0 0
    %338 = vmatpush2.bf16.msra.mxu0 0
    %339 = vmatprep.subr.bf16.mxu0 0
    %340 = vmatpush2.bf16.msra.mxu0 0
    %341 = vmatprep.mubr.bf16.mxu0 0
    %342 = vmatmul.mubr.bf16.gmra.mxu0 %v307
    %v343 = vpop.f32.mrf.mxu0
    %v344 = vadd.f32 %v292, %v343
    %v345 = vpop.f32.mrf.mxu0
    %v346 = vpop.f32.mrf.mxu0
    %v347 = vpop.f32.mrf.mxu0
    %348 = vdwg.mxu0
    %v349 = vxor.u32 %v344, 2147483648
    %v350 = vmul.f32 %v349, 1.442695
    %v351 = vpow.pop %v350
    %v352 = vadd.f32 %v351, 1.0
    %v353 = vrcp.pop %v352
    %v354 = vmul.f32 1.0, %v353
    %vm355 = vcmask 31744
    %356 = vst.msk [vmem:[%s7] sm:$0xff] %vm355, %v354
    // Predicated region
    $region38: #{tpu_custom_call.1} parent=1 // pred_check
      _
    $region39: #{tpu_custom_call.1} parent=1 // pred_check_branch
      %358 = sbr.rel (0) target = $region41
    $region40: #{tpu_custom_call.1} parent=1 // pred_region
      _
    $region41: #{tpu_custom_call.1} parent=1 // pred_fallthru
      _
    // Predicated region
    $region42: #{tpu_custom_call.1} parent=1 // pred_check
      _
    $region43: #{tpu_custom_call.1} parent=1 // pred_check_branch
      %360 = sbr.rel (0) target = $region45
    $region44: #{tpu_custom_call.1} parent=1 // pred_region
      _
    $region45: #{tpu_custom_call.1} parent=1 // pred_fallthru
      _
    %361 = vsyncpa [#allocation3], 1
    %362 = vsyncpa [#allocation5], 1

</llo_original>
